<compile_context>
chip_gen: v5e
topology: v5e:2x2
jax: 0.10.0
libtpu: 0.0.40
codegen_flags: <defaults>
</compile_context>

<pallas_src>
import functools
import math

import jax
import jax.numpy as jnp
from jax import lax
from jax.experimental import pallas as pl
from jax.experimental.pallas import tpu as pltpu

LANE = 128


def _gcn_layer_kernel(a_ref, x_ref, w_ref, b_ref, o_ref, acc_ref, *,
                      epilogue, num_valid):
    """One GCNConv layer, tiled over (row tiles i, contraction tiles k).

    a_ref : [tm, tk]  bf16 tile of A_hat (rows = dst nodes, cols = src nodes)
    x_ref : [tk, Fp]  bf16 tile of node features (or hidden activations)
    w_ref : [Fp, Hp]  bf16 weight (whole, lane-padded)
    b_ref : [1,  Hp]  f32 bias (lane-padded with zeros)
    o_ref : [tm, Hp]  output tile (bf16 hidden for layer 1, f32 log-probs for layer 2)
    acc_ref: [tm, Hp] f32 VMEM accumulator scratch
    """
    k = pl.program_id(1)

    @pl.when(k == 0)
    def _():
        acc_ref[...] = jnp.zeros_like(acc_ref)

    # Per-tile X @ W (small, recompute is negligible), then A_tile @ (XW).
    xw = jnp.dot(x_ref[...], w_ref[...], preferred_element_type=jnp.float32)
    acc_ref[...] += jnp.dot(a_ref[...], xw.astype(a_ref.dtype),
                            preferred_element_type=jnp.float32)

    @pl.when(k == pl.num_programs(1) - 1)
    def _():
        z = acc_ref[...] + b_ref[...]
        if epilogue == "relu":
            o_ref[...] = jnp.maximum(z, 0.0).astype(o_ref.dtype)
        else:  # masked log_softmax over the (padded) class lane axis
            col = lax.broadcasted_iota(jnp.int32, z.shape, 1)
            valid = col < num_valid
            z = jnp.where(valid, z, -jnp.inf)
            z_max = jnp.max(z, axis=1, keepdims=True)
            z_sh = z - z_max
            lse = jnp.log(jnp.sum(jnp.exp(z_sh), axis=1, keepdims=True))
            o_ref[...] = jnp.where(valid, z_sh - lse, 0.0).astype(o_ref.dtype)


def _gcn_conv(a_p, x_p, w_p, b_p, *, tm, tk, epilogue, num_valid, out_dtype):
    n_p = a_p.shape[0]
    f_p = x_p.shape[1]
    h_p = w_p.shape[1]
    grid = (n_p // tm, n_p // tk)

    kernel = functools.partial(_gcn_layer_kernel,
                               epilogue=epilogue, num_valid=num_valid)

    flops = 2 * n_p * n_p * h_p + grid[0] * 2 * n_p * f_p * h_p
    bytes_accessed = (2 * (n_p * n_p + n_p * f_p + f_p * h_p)   # bf16 inputs
                      + 4 * h_p                                  # bias
                      + n_p * h_p * jnp.dtype(out_dtype).itemsize)
    transcendentals = n_p * h_p if epilogue == "log_softmax" else 0

    return pl.pallas_call(
        kernel,
        out_shape=jax.ShapeDtypeStruct((n_p, h_p), out_dtype),
        grid_spec=pltpu.PrefetchScalarGridSpec(
            num_scalar_prefetch=0,
            grid=grid,
            in_specs=[
                pl.BlockSpec((tm, tk), lambda i, k: (i, k)),   # A_hat tile
                pl.BlockSpec((tk, f_p), lambda i, k: (k, 0)),  # X / H tile
                pl.BlockSpec((f_p, h_p), lambda i, k: (0, 0)), # weight (whole)
                pl.BlockSpec((1, h_p), lambda i, k: (0, 0)),   # bias
            ],
            out_specs=pl.BlockSpec((tm, h_p), lambda i, k: (i, 0)),
            scratch_shapes=[pltpu.VMEM((tm, h_p), jnp.float32)],
        ),
        compiler_params=pltpu.CompilerParams(
            dimension_semantics=("parallel", "arbitrary"),
            vmem_limit_bytes=48 * 1024 * 1024,
        ),
        cost_estimate=pl.CostEstimate(
            flops=flops,
            transcendentals=transcendentals,
            bytes_accessed=bytes_accessed,
        ),
    )(a_p, x_p, w_p, b_p)


def gcn_forward(a_hat, x, w1, b1, w2, b2, *, tm=128, tk=128):
    """Forward pass of the 2-layer GCN (eval mode)."""
    n, f_in = x.shape
    h = w1.shape[1]
    c = w2.shape[1]

    step = math.lcm(tm, tk)
    n_p = pl.cdiv(n, step) * step
    f_p = max(LANE, pl.cdiv(f_in, LANE) * LANE)
    h_p = max(LANE, pl.cdiv(h, LANE) * LANE)
    c_p = max(LANE, pl.cdiv(c, LANE) * LANE)

    # Lane-dense, bf16 MXU inputs (f32 accumulation happens in-kernel).
    a_p = jnp.pad(a_hat, ((0, n_p - n), (0, n_p - n))).astype(jnp.bfloat16)
    x_p = jnp.pad(x, ((0, n_p - n), (0, f_p - f_in))).astype(jnp.bfloat16)
    w1_p = jnp.pad(w1, ((0, f_p - f_in), (0, h_p - h))).astype(jnp.bfloat16)
    b1_p = jnp.pad(b1.reshape(1, -1), ((0, 0), (0, h_p - h))).astype(jnp.float32)
    w2_p = jnp.pad(w2, ((0, h_p - h), (0, c_p - c))).astype(jnp.bfloat16)
    b2_p = jnp.pad(b2.reshape(1, -1), ((0, 0), (0, c_p - c))).astype(jnp.float32)

    # Layer 1: relu(A_hat @ (X @ W1) + b1), hidden kept in bf16 for layer 2.
    hid = _gcn_conv(a_p, x_p, w1_p, b1_p, tm=tm, tk=tk,
                    epilogue="relu", num_valid=h_p, out_dtype=jnp.bfloat16)

    # TODO(synk): F.dropout(x, training=self.training) — identity in eval mode;
    # training-mode dropout would mask `hid` with pltpu.prng_seed / prng_random_bits.

    # Layer 2: log_softmax(A_hat @ (H @ W2) + b2) over the class axis.
    logp = _gcn_conv(a_p, hid, w2_p, b2_p, tm=tm, tk=tk,
                     epilogue="log_softmax", num_valid=c, out_dtype=jnp.float32)

    return logp[:n, :c]


def build_normalized_adjacency(edge_index, num_nodes):
    """Dense A_hat = D^-1/2 (A + I) D^-1/2, PyG GCNConv convention."""
    src, dst = edge_index[0], edge_index[1]
    loop = jnp.arange(num_nodes, dtype=src.dtype)
    src = jnp.concatenate([src, loop])
    dst = jnp.concatenate([dst, loop])
    adj = jnp.zeros((num_nodes, num_nodes), jnp.float32).at[dst, src].add(1.0)
    deg = jnp.sum(adj, axis=1)
    dinv = jnp.where(deg > 0, 1.0 / jnp.sqrt(deg), 0.0)
    return dinv[:, None] * adj * dinv[None, :]


def glorot(key, shape):
    fan_in, fan_out = shape
    limit = jnp.sqrt(6.0 / (fan_in + fan_out))
    return jax.random.uniform(key, shape, jnp.float32, -limit, limit)


def gcn_reference(a_hat, x, w1, b1, w2, b2):
    h = jnp.maximum(a_hat @ (x @ w1) + b1, 0.0)
    z = a_hat @ (h @ w2) + b2
    return jax.nn.log_softmax(z, axis=1)


if __name__ == "__main__":
    # Small synthetic "Cora-like" graph (N deliberately NOT a tile multiple
    # to exercise the padding path).
    N = 200        # nodes
    F_IN = 16      # num_node_features
    HIDDEN = 16    # GCNConv hidden dim (as in the module)
    C = 8          # num_classes
    E = 800        # directed edges

    key = jax.random.PRNGKey(0)
    k_x, k_src, k_dst, k_w1, k_w2 = jax.random.split(key, 5)

    x = jax.random.normal(k_x, (N, F_IN), jnp.float32)
    edge_index = jnp.stack([
        jax.random.randint(k_src, (E,), 0, N),
        jax.random.randint(k_dst, (E,), 0, N),
    ])

    # Deterministic parameter init (GCNConv: glorot weights, zero bias).
    w1 = glorot(k_w1, (F_IN, HIDDEN))
    b1 = jnp.zeros((HIDDEN,), jnp.float32)
    w2 = glorot(k_w2, (HIDDEN, C))
    b2 = jnp.zeros((C,), jnp.float32)

    a_hat = build_normalized_adjacency(edge_index, N)

    out = gcn_forward(a_hat, x, w1, b1, w2, b2)
    out = jax.block_until_ready(out)

    # Sanity: shape, rows of log_softmax exp-sum to 1, matches f32 reference
    # (loose tolerance: bf16 MXU inputs).
    ref = gcn_reference(a_hat, x, w1, b1, w2, b2)
    row_sums = jnp.exp(out).sum(axis=1)
    assert out.shape == (N, C)
    assert bool(jnp.allclose(row_sums, 1.0, atol=1e-3))
    assert bool(jnp.allclose(out, ref, atol=1e-1, rtol=1e-1))

    print("KERNEL_OK")
</pallas_src>

<mosaic_0001>
module attributes {stable_mosaic.version = 11 : i64} {
  func.func @_gcn_layer_kernel(%arg0: i32, %arg1: i32, %arg2: memref<128x128xbf16, #tpu.memory_space<vmem>>, %arg3: memref<128x128xbf16, #tpu.memory_space<vmem>>, %arg4: memref<128x128xbf16, #tpu.memory_space<vmem>>, %arg5: memref<1x128xf32, #tpu.memory_space<vmem>>, %arg6: memref<128x128xbf16, #tpu.memory_space<vmem>>, %arg7: memref<128x128xf32, #tpu.memory_space<vmem>>) attributes {dimension_semantics = [#tpu.dimension_semantics<parallel>, #tpu.dimension_semantics<arbitrary>], iteration_bounds = array<i64: 2, 2>, scalar_prefetch = 0 : i64, scratch_operands = 1 : i64, tpu.core_type = #tpu.core_type<tc>, window_params = [{transform_indices = @transform_0, window_bounds = array<i64: 128, 128>}, {transform_indices = @transform_1, window_bounds = array<i64: 128, 128>}, {pipeline_mode = #tpu.pipeline_mode<synchronous>, transform_indices = @transform_2, window_bounds = array<i64: 128, 128>}, {pipeline_mode = #tpu.pipeline_mode<synchronous>, transform_indices = @transform_3, window_bounds = array<i64: 1, 128>}, {transform_indices = @transform_4, window_bounds = array<i64: 128, 128>}]} {
    %c0_i32 = arith.constant 0 : i32
    %0 = arith.cmpi eq, %arg1, %c0_i32 : i32
    %1 = arith.extui %0 : i1 to i32
    %c0_i32_0 = arith.constant 0 : i32
    %2 = arith.cmpi ne, %1, %c0_i32_0 : i32
    scf.if %2 {
      %cst_12 = arith.constant 0.000000e+00 : f32
      %15 = vector.broadcast %cst_12 : f32 to vector<128x128xf32>
      %c0_13 = arith.constant 0 : index
      %c0_14 = arith.constant 0 : index
      %16 = vector.load %arg7[%c0_13, %c0_14] : memref<128x128xf32, #tpu.memory_space<vmem>>, vector<128x128xf32>
      tpu.vector_store %arg7[%c0_13, %c0_14], %15 {strides = array<i32>} : memref<128x128xf32, #tpu.memory_space<vmem>>, vector<128x128xf32>,
    } else {
    }
    %c0 = arith.constant 0 : index
    %c0_1 = arith.constant 0 : index
    %3 = vector.load %arg3[%c0, %c0_1] : memref<128x128xbf16, #tpu.memory_space<vmem>>, vector<128x128xbf16>
    %c0_2 = arith.constant 0 : index
    %c0_3 = arith.constant 0 : index
    %4 = vector.load %arg4[%c0_2, %c0_3] : memref<128x128xbf16, #tpu.memory_space<vmem>>, vector<128x128xbf16>
    %cst = arith.constant dense<0.000000e+00> : vector<128x128xf32>
    %5 = tpu.matmul %3, %4, %cst {dimension_numbers = #tpu.dot_dimension_numbers<[1], [0], [0], [1], [0, 0, 1, 1], [], []>} : vector<128x128xbf16>, vector<128x128xbf16>, vector<128x128xf32> -> vector<128x128xf32>
    %c0_4 = arith.constant 0 : index
    %c0_5 = arith.constant 0 : index
    %6 = vector.load %arg7[%c0_4, %c0_5] : memref<128x128xf32, #tpu.memory_space<vmem>>, vector<128x128xf32>
    %c0_6 = arith.constant 0 : index
    %c0_7 = arith.constant 0 : index
    %7 = vector.load %arg2[%c0_6, %c0_7] : memref<128x128xbf16, #tpu.memory_space<vmem>>, vector<128x128xbf16>
    %8 = arith.truncf %5 : vector<128x128xf32> to vector<128x128xbf16>
    %cst_8 = arith.constant dense<0.000000e+00> : vector<128x128xf32>
    %9 = tpu.matmul %7, %8, %cst_8 {dimension_numbers = #tpu.dot_dimension_numbers<[1], [0], [0], [1], [0, 0, 1, 1], [], []>} : vector<128x128xbf16>, vector<128x128xbf16>, vector<128x128xf32> -> vector<128x128xf32>
    %10 = arith.addf %6, %9 : vector<128x128xf32>
    %c0_9 = arith.constant 0 : index
    %c0_10 = arith.constant 0 : index
    %11 = vector.load %arg7[%c0_9, %c0_10] : memref<128x128xf32, #tpu.memory_space<vmem>>, vector<128x128xf32>
    tpu.vector_store %arg7[%c0_9, %c0_10], %10 {strides = array<i32>} : memref<128x128xf32, #tpu.memory_space<vmem>>, vector<128x128xf32>,
    %c1_i32 = arith.constant 1 : i32
    %12 = arith.cmpi eq, %arg1, %c1_i32 : i32
    %13 = arith.extui %12 : i1 to i32
    %c0_i32_11 = arith.constant 0 : i32
    %14 = arith.cmpi ne, %13, %c0_i32_11 : i32
    scf.if %14 {
      %c0_12 = arith.constant 0 : index
      %c0_13 = arith.constant 0 : index
      %15 = vector.load %arg7[%c0_12, %c0_13] : memref<128x128xf32, #tpu.memory_space<vmem>>, vector<128x128xf32>
      %c0_14 = arith.constant 0 : index
      %c0_15 = arith.constant 0 : index
      %16 = vector.load %arg5[%c0_14, %c0_15] : memref<1x128xf32, #tpu.memory_space<vmem>>, vector<1x128xf32>
      %17 = vector.broadcast %16 : vector<1x128xf32> to vector<128x128xf32>
      %18 = arith.addf %15, %17 : vector<128x128xf32>
      %cst_16 = arith.constant 0.000000e+00 : f32
      %19 = vector.broadcast %cst_16 : f32 to vector<128x128xf32>
      %20 = arith.maximumf %18, %19 : vector<128x128xf32>
      %21 = arith.truncf %20 : vector<128x128xf32> to vector<128x128xbf16>
      %c0_17 = arith.constant 0 : index
      %c0_18 = arith.constant 0 : index
      %22 = vector.load %arg6[%c0_17, %c0_18] : memref<128x128xbf16, #tpu.memory_space<vmem>>, vector<128x128xbf16>
      tpu.vector_store %arg6[%c0_17, %c0_18], %21 {strides = array<i32>} : memref<128x128xbf16, #tpu.memory_space<vmem>>, vector<128x128xbf16>,
    } else {
    }
    return
  }
  func.func @transform_0(%arg0: i32, %arg1: i32) -> (i32, i32) {
    %c0_i32 = arith.constant 0 : i32
    return %arg0, %arg1 : i32, i32
  }
  func.func @transform_1(%arg0: i32, %arg1: i32) -> (i32, i32) {
    %c0_i32 = arith.constant 0 : i32
    %c0_i32_0 = arith.constant 0 : i32
    return %arg1, %c0_i32 : i32, i32
  }
  func.func @transform_2(%arg0: i32, %arg1: i32) -> (i32, i32) {
    %c0_i32 = arith.constant 0 : i32
    %c0_i32_0 = arith.constant 0 : i32
    %c0_i32_1 = arith.constant 0 : i32
    return %c0_i32, %c0_i32_0 : i32, i32
  }
  func.func @transform_3(%arg0: i32, %arg1: i32) -> (i32, i32) {
    %c0_i32 = arith.constant 0 : i32
    %c0_i32_0 = arith.constant 0 : i32
    %c0_i32_1 = arith.constant 0 : i32
    return %c0_i32, %c0_i32_0 : i32, i32
  }
  func.func @transform_4(%arg0: i32, %arg1: i32) -> (i32, i32) {
    %c0_i32 = arith.constant 0 : i32
    %c0_i32_0 = arith.constant 0 : i32
    return %arg0, %c0_i32 : i32, i32
  }
}

</mosaic_0001>

<llo_original>
// kernel: tpu_custom_call.1
$region0: #{tpu_custom_call.1}
  #allocation0 [shape = 'u32[]', space=smem, size = 0x4, offset = 0x4, fixed_abs, tag = 'smem constant byte address 0x4 - core index']
  #allocation1 [shape = 'u32[72,128]{1,0:T(1,128)}', space=vmem, size = 0x9000, scoped, tag = 'internal scratch']
  #allocation2 [shape = 'f32[128,128]{1,0:T(8,128)}', space=vmem, size = 0x10000, scoped, tag = 'scratch operand']
  %s0 = inlined_call_operand.hbm [shape: bf16[256,256], index: 0, kind: input, shape index: {}]
  %s1 = inlined_call_operand.hbm [shape: bf16[256,128], index: 1, kind: input, shape index: {}]
  %s2 = inlined_call_operand.hbm [shape: bf16[128,128], index: 2, kind: input, shape index: {}]
  %s3 = inlined_call_operand.vmem [shape: f32[1,128], index: 3, kind: input, shape index: {}]
  %s4 = inlined_call_operand.hbm [shape: bf16[256,128], index: 4, kind: output, shape index: {}]
  %s5 = sld [smem:[#allocation0]]
  $region69: #{tpu_custom_call.1} parent=0
    _
  %s7 = ssub.s32 1, %s5
  %s8 = scalar_select 0, %s7, %s5
  $region1: #{tpu_custom_call.1} parent=0
    #allocation3 [shape = 'u8[65536]{0}', space=vmem, size = 0x10000, scoped, tag = 'input window, operand 0']
    #allocation4 [shape = 's32[2]{0}', space=sflag, size = 0x8, scoped, tag = 'scoped memory for tpu_custom_call.1']
    #allocation5 [shape = 's32[2]{0}', space=sflag, size = 0x8, scoped, tag = 'scoped memory for tpu_custom_call.1']
    #allocation6 [shape = 'u8[65536]{0}', space=vmem, size = 0x10000, scoped, tag = 'input window, operand 1']
    #allocation7 [shape = 's32[2]{0}', space=sflag, size = 0x8, scoped, tag = 'scoped memory for tpu_custom_call.1']
    #allocation8 [shape = 'u8[32768]{0}', space=vmem, size = 0x8000, scoped, tag = 'input window, operand 2, single buffered']
    #allocation9 [shape = 'u8[65536]{0}', space=vmem, size = 0x10000, scoped, tag = 'output window, operand 0']
    %9 = vsyncpa [#allocation4], 0
    %s10 = scalar_lea.sflag [#allocation4], 1
    %11 = vsyncpa %s10, 0
    %12 = vsyncpa [#allocation7], 0
    %s13 = scalar_lea.sflag [#allocation7], 1
    %14 = vsyncpa %s13, 0
    %15 = vsyncpa [#allocation5], 0
    %s16 = scalar_lea.sflag [#allocation5], 1
    %17 = vsyncpa %s16, 0
    loop: start=0, step=1, limit=6
    $region2: #{tpu_custom_call.1} parent=1 // loop_pre_header
      _
    $region3: #{tpu_custom_call.1} parent=1 // loop_header
      %s19 = sphi 0, %s23
      %p20 = scmp.ge.s32.totalorder %s19, 6
      %s26 = sphi 0, %s38
      %s27 = sphi 0, %s34
      %s28 = sphi 0, %s26
      %s29 = sphi 0, %s27
      %s30 = sphi 0, %s28
      %s31 = sphi 0, %s29
      %s43 = sphi 0, %s45
      %s46 = sphi 0, %s43
      %s47 = sphi 0, %s46
      %s63 = sphi 0, %s47
      %s69 = sphi 0, %s71
      %s72 = sphi 0, %s69
      %s73 = sphi 0, %s72
      %s89 = sphi 0, %s73
      %s93 = sphi 0, %s93
      %s95 = sphi 0, %s93
      %s96 = sphi 0, %s95
      %s110 = sphi 0, %s96
      %s114 = sphi 0, %s114
      %s116 = sphi 0, %s114
      %s117 = sphi 0, %s116
      %s131 = sphi 0, %s117
      %s137 = sphi 0, %s139
      %s140 = sphi 0, %s137
      %s141 = sphi 0, %s140
      %s157 = sphi 0, %s141
    $region4: #{tpu_custom_call.1} parent=1 // loop_header_branch
      %22 = sbr.rel (%p20) target = $region8
    $region5: #{tpu_custom_call.1} parent=1 // loop_body
      %s24 = ssub.s32 %s19, 1
      %s25 = ssub.s32 %s19, 2
      %s32 = sadd.s32 1, %s27
      %p33 = scmp.ge.s32.totalorder %s32, 2
      %s34 = scalar_select %p33, 0, %s32
      %s35 = sadd.s32 1, %s26
      %s36 = scalar_select %p33, %s35, %s26
      %p37 = scmp.ge.s32.totalorder %s36, 2
      %s38 = scalar_select %p37, 0, %s36
      %s39 = ssub.s32 %s26, %s38
      %s40 = ssub.s32 %s27, %s34
      %s41 = sor.u32 %s39, %s40
      %p42 = scmp.eq.s32.totalorder %s41, 0
      %s44 = sadd.s32 %s43, 1
      %s45 = scalar_select %p42, %s43, %s44
      %p48 = pneg %p42
      %p49 = scmp.eq.s32.totalorder %s19, 3
      %p50 = por %p48, %p49
      %p51 = scmp.ne.s32.totalorder %s43, %s46
      %p52 = scmp.eq.s32.totalorder %s19, 0
      %p53 = por %p51, %p52
      %p54 = scmp.ne.s32.totalorder %s43, %s46
      %p55 = scmp.eq.s32.totalorder %s24, 3
      %p56 = por %p54, %p55
      %p57 = scmp.ne.s32.totalorder %s46, %s47
      %p58 = scmp.eq.s32.totalorder %s24, 0
      %p59 = por %p57, %p58
      %p60 = scmp.ne.s32.totalorder %s46, %s47
      %p61 = scmp.eq.s32.totalorder %s25, 3
      %p62 = por %p60, %p61
      %p64 = scmp.ne.s32.totalorder %s47, %s63
      %p65 = scmp.eq.s32.totalorder %s25, 0
      %p66 = por %p64, %p65
      %s67 = ssub.s32 %s27, %s34
      %p68 = scmp.eq.s32.totalorder %s67, 0
      %s70 = sadd.s32 %s69, 1
      %s71 = scalar_select %p68, %s69, %s70
      %p74 = pneg %p68
      %p75 = scmp.eq.s32.totalorder %s19, 3
      %p76 = por %p74, %p75
      %p77 = scmp.ne.s32.totalorder %s69, %s72
      %p78 = scmp.eq.s32.totalorder %s19, 0
      %p79 = por %p77, %p78
      %p80 = scmp.ne.s32.totalorder %s69, %s72
      %p81 = scmp.eq.s32.totalorder %s24, 3
      %p82 = por %p80, %p81
      %p83 = scmp.ne.s32.totalorder %s72, %s73
      %p84 = scmp.eq.s32.totalorder %s24, 0
      %p85 = por %p83, %p84
      %p86 = scmp.ne.s32.totalorder %s72, %s73
      %p87 = scmp.eq.s32.totalorder %s25, 3
      %p88 = por %p86, %p87
      %p90 = scmp.ne.s32.totalorder %s73, %s89
      %p91 = scmp.eq.s32.totalorder %s25, 0
      %p92 = por %p90, %p91
      %s94 = sadd.s32 %s93, 1
      %p97 = scmp.eq.s32.totalorder %s19, 3
      %p98 = scmp.ne.s32.totalorder %s93, %s95
      %p99 = scmp.eq.s32.totalorder %s19, 0
      %p100 = por %p98, %p99
      %p101 = scmp.ne.s32.totalorder %s93, %s95
      %p102 = scmp.eq.s32.totalorder %s24, 3
      %p103 = por %p101, %p102
      %p104 = scmp.ne.s32.totalorder %s95, %s96
      %p105 = scmp.eq.s32.totalorder %s24, 0
      %p106 = por %p104, %p105
      %p107 = scmp.ne.s32.totalorder %s95, %s96
      %p108 = scmp.eq.s32.totalorder %s25, 3
      %p109 = por %p107, %p108
      %p111 = scmp.ne.s32.totalorder %s96, %s110
      %p112 = scmp.eq.s32.totalorder %s25, 0
      %p113 = por %p111, %p112
      %s115 = sadd.s32 %s114, 1
      %p118 = scmp.eq.s32.totalorder %s19, 3
      %p119 = scmp.ne.s32.totalorder %s114, %s116
      %p120 = scmp.eq.s32.totalorder %s19, 0
      %p121 = por %p119, %p120
      %p122 = scmp.ne.s32.totalorder %s114, %s116
      %p123 = scmp.eq.s32.totalorder %s24, 3
      %p124 = por %p122, %p123
      %p125 = scmp.ne.s32.totalorder %s116, %s117
      %p126 = scmp.eq.s32.totalorder %s24, 0
      %p127 = por %p125, %p126
      %p128 = scmp.ne.s32.totalorder %s116, %s117
      %p129 = scmp.eq.s32.totalorder %s25, 3
      %p130 = por %p128, %p129
      %p132 = scmp.ne.s32.totalorder %s117, %s131
      %p133 = scmp.eq.s32.totalorder %s25, 0
      %p134 = por %p132, %p133
      %s135 = ssub.s32 %s26, %s38
      %p136 = scmp.eq.s32.totalorder %s135, 0
      %s138 = sadd.s32 %s137, 1
      %s139 = scalar_select %p136, %s137, %s138
      %p142 = pneg %p136
      %p143 = scmp.eq.s32.totalorder %s19, 3
      %p144 = por %p142, %p143
      %p145 = scmp.ne.s32.totalorder %s137, %s140
      %p146 = scmp.eq.s32.totalorder %s19, 0
      %p147 = por %p145, %p146
      %p148 = scmp.ne.s32.totalorder %s137, %s140
      %p149 = scmp.eq.s32.totalorder %s24, 3
      %p150 = por %p148, %p149
      %p151 = scmp.ne.s32.totalorder %s140, %s141
      %p152 = scmp.eq.s32.totalorder %s24, 0
      %p153 = por %p151, %p152
      %p154 = scmp.ne.s32.totalorder %s140, %s141
      %p155 = scmp.eq.s32.totalorder %s25, 3
      %p156 = por %p154, %p155
      %p158 = scmp.ne.s32.totalorder %s141, %s157
      %p159 = scmp.eq.s32.totalorder %s25, 0
      %p160 = por %p158, %p159
      %p161 = scmp.le.s32.totalorder 1, %s19
      %p162 = scmp.lt.s32.totalorder %s19, 5
      %p163 = pnand %p161, %p162
      %p164 = pneg %p163
      // Predicated region
      $region9: #{tpu_custom_call.1} parent=5 // pred_check
        _
      $region10: #{tpu_custom_call.1} parent=5 // pred_check_branch
        %166 = sbr.rel (%p163) target = $region12
      $region11: #{tpu_custom_call.1} parent=5 // pred_region
        %s167 = ssub.s32 %s19, 1
        // Predicated region
        $region13: #{tpu_custom_call.1} parent=11 // pred_check
          %p168 = pneg %p106
        $region14: #{tpu_custom_call.1} parent=11 // pred_check_branch
          %170 = sbr.rel (%p168) target = $region16
        $region15: #{tpu_custom_call.1} parent=11 // pred_region
          %172 = vsyncadd [#allocation7], 0
          %s173 = sshll.u32 %s2, 4
          %s174 = int_to_ptr.hbm [resolvable:$true] %s173
          %s175 = sshll.u32 [#allocation8], 4
          %s176 = int_to_ptr.vmem [resolvable:$true] %s175
          %181 = dma.hbm_to_vmem [thread:$0]  %s174, 1024, %s176, [#allocation7], 64, 64, 4
        $region16: #{tpu_custom_call.1} parent=11 // pred_fallthru
          _
        // Predicated region
        $region17: #{tpu_custom_call.1} parent=11 // pred_check
          %p182 = pneg %p127
        $region18: #{tpu_custom_call.1} parent=11 // pred_check_branch
          %184 = sbr.rel (%p182) target = $region20
        $region19: #{tpu_custom_call.1} parent=11 // pred_region
          _
        $region20: #{tpu_custom_call.1} parent=11 // pred_fallthru
          _
      $region12: #{tpu_custom_call.1} parent=5 // pred_fallthru
        _
      %p185 = scmp.lt.s32.totalorder %s19, 4
      // Predicated region
      $region21: #{tpu_custom_call.1} parent=5 // pred_check
        %p186 = pneg %p185
      $region22: #{tpu_custom_call.1} parent=5 // pred_check_branch
        %188 = sbr.rel (%p186) target = $region24
      $region23: #{tpu_custom_call.1} parent=5 // pred_region
        // Predicated region
        $region25: #{tpu_custom_call.1} parent=23 // pred_check
          %p189 = pneg %p53
        $region26: #{tpu_custom_call.1} parent=23 // pred_check_branch
          %191 = sbr.rel (%p189) target = $region28
        $region27: #{tpu_custom_call.1} parent=23 // pred_region
          %s192 = sand.u32 %s43, 1
          %s193 = scalar_lea.sflag [#allocation4], %s192
          %s194 = sand.u32 %s43, 1
          %s195 = smul.addr %s194, 64
          %s196 = scalar_lea.vmem [#allocation3], %s195
          %s197 = smul.u32 16, %s26
          %199 = vsyncadd %s193, 0
          %s200 = smul.addr %s197, 2
          %s201 = sadd.s32 %s27, %s200
          %s202 = smul.addr %s201, 4
          %s203 = scalar_lea.hbm %s0, %s202
          %s204 = sshll.u32 %s203, 4
          %s205 = int_to_ptr.hbm [resolvable:$true] %s204
          %s206 = sshll.u32 %s196, 4
          %s207 = int_to_ptr.vmem [resolvable:$true] %s206
          %212 = dma.hbm_to_vmem [thread:$0]  %s205, 1024, %s207, %s193, 128, 64, 4
        $region28: #{tpu_custom_call.1} parent=23 // pred_fallthru
          _
        // Predicated region
        $region29: #{tpu_custom_call.1} parent=23 // pred_check
          %p213 = pneg %p79
        $region30: #{tpu_custom_call.1} parent=23 // pred_check_branch
          %215 = sbr.rel (%p213) target = $region32
        $region31: #{tpu_custom_call.1} parent=23 // pred_region
          %s216 = sand.u32 %s19, 1
          %s217 = scalar_lea.sflag [#allocation7], %s216
          %s218 = sand.u32 %s69, 1
          %s219 = smul.addr %s218, 64
          %s220 = scalar_lea.vmem [#allocation6], %s219
          %s221 = smul.u32 16, %s27
          %223 = vsyncadd %s217, 0
          %s224 = smul.addr %s221, 4
          %s225 = scalar_lea.hbm %s1, %s224
          %s226 = sshll.u32 %s225, 4
          %s227 = int_to_ptr.hbm [resolvable:$true] %s226
          %s228 = sshll.u32 %s220, 4
          %s229 = int_to_ptr.vmem [resolvable:$true] %s228
          %234 = dma.hbm_to_vmem [thread:$0]  %s227, 1024, %s229, %s217, 64, 64, 4
        $region32: #{tpu_custom_call.1} parent=23 // pred_fallthru
          _
      $region24: #{tpu_custom_call.1} parent=5 // pred_fallthru
        _
      %p235 = scmp.le.s32.totalorder 1, %s19
      %p236 = scmp.lt.s32.totalorder %s19, 5
      %p237 = pnand %p235, %p236
      %p238 = pneg %p237
      // Predicated region
      $region33: #{tpu_custom_call.1} parent=5 // pred_check
        _
      $region34: #{tpu_custom_call.1} parent=5 // pred_check_branch
        %240 = sbr.rel (%p237) target = $region36
      $region35: #{tpu_custom_call.1} parent=5 // pred_region
        %s241 = ssub.s32 %s19, 1
        %s242 = sand.u32 %s46, 1
        %s243 = scalar_lea.sflag [#allocation4], %s242
        %s244 = sand.u32 %s46, 1
        %s245 = smul.addr %s244, 64
        %s246 = scalar_lea.vmem [#allocation3], %s245
        // Predicated region
        $region37: #{tpu_custom_call.1} parent=35 // pred_check
          %p247 = pneg %p59
        $region38: #{tpu_custom_call.1} parent=35 // pred_check_branch
          %249 = sbr.rel (%p247) target = $region40
        $region39: #{tpu_custom_call.1} parent=35 // pred_region
          %251 = dma.done %s243, 1024
        $region40: #{tpu_custom_call.1} parent=35 // pred_fallthru
          _
        %s252 = sand.u32 %s24, 1
        %s253 = scalar_lea.sflag [#allocation7], %s252
        %s254 = sand.u32 %s72, 1
        %s255 = smul.addr %s254, 64
        %s256 = scalar_lea.vmem [#allocation6], %s255
        // Predicated region
        $region41: #{tpu_custom_call.1} parent=35 // pred_check
          %p257 = pneg %p85
        $region42: #{tpu_custom_call.1} parent=35 // pred_check_branch
          %259 = sbr.rel (%p257) target = $region44
        $region43: #{tpu_custom_call.1} parent=35 // pred_region
          %261 = dma.done %s253, 1024
        $region44: #{tpu_custom_call.1} parent=35 // pred_fallthru
          _
        // Predicated region
        $region45: #{tpu_custom_call.1} parent=35 // pred_check
          %p262 = pneg %p106
        $region46: #{tpu_custom_call.1} parent=35 // pred_check_branch
          %264 = sbr.rel (%p262) target = $region48
        $region47: #{tpu_custom_call.1} parent=35 // pred_region
          %266 = dma.done [#allocation7], 1024
        $region48: #{tpu_custom_call.1} parent=35 // pred_fallthru
          _
        %s267 = sand.u32 %s46, 1
        %s268 = scalar_lea.sflag [#allocation4], %s267
        %s269 = sand.u32 %s46, 1
        %s270 = smul.addr %s269, 64
        %s271 = scalar_lea.vmem [#allocation3], %s270
        %p272 = pneg %p59
        %p273 = pneg %p56
        %s274 = sand.u32 %s24, 1
        %s275 = scalar_lea.sflag [#allocation7], %s274
        %s276 = sand.u32 %s72, 1
        %s277 = smul.addr %s276, 64
        %s278 = scalar_lea.vmem [#allocation6], %s277
        %p279 = pneg %p85
        %p280 = pneg %p82
        %p281 = pneg %p106
        %p282 = pneg %p103
        %p283 = pneg %p127
        %p284 = pneg %p124
        %p285 = pneg %p153
        %p286 = pneg %p150
        %s287 = sand.u32 %s140, 1
        %s288 = scalar_lea.sflag [#allocation5], %s287
        %s289 = sand.u32 %s140, 1
        %s290 = smul.addr %s289, 64
        %s291 = scalar_lea.vmem [#allocation9], %s290
        %s292 = smul.u32 16, %s28
        %s293 = smul.u32 16, %s29
        %s294 = smul.u32 16, %s28
        %p295 = scmp.eq.s32.totalorder %s29, 0
        // Predicated region
        $region49: #{tpu_custom_call.1} parent=35 // pred_check
          %p296 = pneg %p295
        $region50: #{tpu_custom_call.1} parent=35 // pred_check_branch
          %298 = sbr.rel (%p296) target = $region52
        $region51: #{tpu_custom_call.1} parent=35 // pred_region
          %299 = vst [vmem:[#allocation2] sm:$0xff] 0.0
          %300 = vst [vmem:[#allocation2 + $0x8] sm:$0xff] 0.0
          %301 = vst [vmem:[#allocation2 + $0x10] sm:$0xff] 0.0
          %302 = vst [vmem:[#allocation2 + $0x18] sm:$0xff] 0.0
          %303 = vst [vmem:[#allocation2 + $0x20] sm:$0xff] 0.0
          %304 = vst [vmem:[#allocation2 + $0x28] sm:$0xff] 0.0
          %305 = vst [vmem:[#allocation2 + $0x30] sm:$0xff] 0.0
          %306 = vst [vmem:[#allocation2 + $0x38] sm:$0xff] 0.0
          %307 = vst [vmem:[#allocation2 + $0x40] sm:$0xff] 0.0
          %308 = vst [vmem:[#allocation2 + $0x48] sm:$0xff] 0.0
          %309 = vst [vmem:[#allocation2 + $0x50] sm:$0xff] 0.0
          %310 = vst [vmem:[#allocation2 + $0x58] sm:$0xff] 0.0
          %311 = vst [vmem:[#allocation2 + $0x60] sm:$0xff] 0.0
          %312 = vst [vmem:[#allocation2 + $0x68] sm:$0xff] 0.0
          %313 = vst [vmem:[#allocation2 + $0x70] sm:$0xff] 0.0
          %314 = vst [vmem:[#allocation2 + $0x78] sm:$0xff] 0.0
        $region52: #{tpu_custom_call.1} parent=35 // pred_fallthru
          _
        %v315 = vld [vmem:[%s256] sm:$0xf]
        %v316 = vld [vmem:[%s256 + $0x4] sm:$0xf]
        %v317 = vld [vmem:[%s256 + $0x8] sm:$0xf]
        %v318 = vld [vmem:[%s256 + $0xc] sm:$0xf]
        %v319 = vld [vmem:[%s256 + $0x10] sm:$0xf]
        %v320 = vld [vmem:[%s256 + $0x14] sm:$0xf]
        %v321 = vld [vmem:[%s256 + $0x18] sm:$0xf]
        %v322 = vld [vmem:[%s256 + $0x1c] sm:$0xf]
        %v323 = vld [vmem:[%s256 + $0x20] sm:$0xf]
        %v324 = vld [vmem:[%s256 + $0x24] sm:$0xf]
        %v325 = vld [vmem:[%s256 + $0x28] sm:$0xf]
        %v326 = vld [vmem:[%s256 + $0x2c] sm:$0xf]
        %v327 = vld [vmem:[%s256 + $0x30] sm:$0xf]
        %v328 = vld [vmem:[%s256 + $0x34] sm:$0xf]
        %v329 = vld [vmem:[%s256 + $0x38] sm:$0xf]
        %v330 = vld [vmem:[%s256 + $0x3c] sm:$0xf]
        %v331 = vld [vmem:[#allocation8] sm:$0xf]
        %v332 = vld [vmem:[#allocation8 + $0x4] sm:$0xf]
        %v333 = vld [vmem:[#allocation8 + $0x8] sm:$0xf]
        %v334 = vld [vmem:[#allocation8 + $0xc] sm:$0xf]
        %v335 = vld [vmem:[#allocation8 + $0x10] sm:$0xf]
        %v336 = vld [vmem:[#allocation8 + $0x14] sm:$0xf]
        %v337 = vld [vmem:[#allocation8 + $0x18] sm:$0xf]
        %v338 = vld [vmem:[#allocation8 + $0x1c] sm:$0xf]
        %v339 = vld [vmem:[#allocation8 + $0x20] sm:$0xf]
        %v340 = vld [vmem:[#allocation8 + $0x24] sm:$0xf]
        %v341 = vld [vmem:[#allocation8 + $0x28] sm:$0xf]
        %v342 = vld [vmem:[#allocation8 + $0x2c] sm:$0xf]
        %v343 = vld [vmem:[#allocation8 + $0x30] sm:$0xf]
        %v344 = vld [vmem:[#allocation8 + $0x34] sm:$0xf]
        %v345 = vld [vmem:[#allocation8 + $0x38] sm:$0xf]
        %v346 = vld [vmem:[#allocation8 + $0x3c] sm:$0xf]
        %v363 = vunpack.c.l.b16 %v315
        %v364 = vunpack.c.l.b16 %v316
        %v365 = vunpack.c.l.b16 %v317
        %v366 = vunpack.c.l.b16 %v318
        %v367 = vunpack.c.l.b16 %v319
        %v368 = vunpack.c.l.b16 %v320
        %v369 = vunpack.c.l.b16 %v321
        %v370 = vunpack.c.l.b16 %v322
        %v371 = vunpack.c.l.b16 %v323
        %v372 = vunpack.c.l.b16 %v324
        %v373 = vunpack.c.l.b16 %v325
        %v374 = vunpack.c.l.b16 %v326
        %v375 = vunpack.c.l.b16 %v327
        %v376 = vunpack.c.l.b16 %v328
        %v377 = vunpack.c.l.b16 %v329
        %v378 = vunpack.c.l.b16 %v330
        %v379 = vpack.c.b16 %v364, %v363
        %v380 = vpack.c.b16 %v366, %v365
        %v381 = vpack.c.b16 %v368, %v367
        %v382 = vpack.c.b16 %v370, %v369
        %v383 = vpack.c.b16 %v372, %v371
        %v384 = vpack.c.b16 %v374, %v373
        %v385 = vpack.c.b16 %v376, %v375
        %v386 = vpack.c.b16 %v378, %v377
        %v411 = vunpack.c.l.b16 %v331
        %v412 = vunpack.c.l.b16 %v332
        %v413 = vunpack.c.l.b16 %v333
        %v414 = vunpack.c.l.b16 %v334
        %v415 = vunpack.c.l.b16 %v335
        %v416 = vunpack.c.l.b16 %v336
        %v417 = vunpack.c.l.b16 %v337
        %v418 = vunpack.c.l.b16 %v338
        %v419 = vunpack.c.l.b16 %v339
        %v420 = vunpack.c.l.b16 %v340
        %v421 = vunpack.c.l.b16 %v341
        %v422 = vunpack.c.l.b16 %v342
        %v423 = vunpack.c.l.b16 %v343
        %v424 = vunpack.c.l.b16 %v344
        %v425 = vunpack.c.l.b16 %v345
        %v426 = vunpack.c.l.b16 %v346
        %v427 = vpack.c.b16 %v412, %v411
        %v428 = vpack.c.b16 %v414, %v413
        %v429 = vpack.c.b16 %v416, %v415
        %v430 = vpack.c.b16 %v418, %v417
        %v431 = vpack.c.b16 %v420, %v419
        %v432 = vpack.c.b16 %v422, %v421
        %v433 = vpack.c.b16 %v424, %v423
        %v434 = vpack.c.b16 %v426, %v425
        %443 = vmatpush.bf16.msra.mxu0 %v434
        %444 = vmatpush.bf16.msra.mxu0 %v433
        %445 = vmatpush.bf16.msra.mxu0 %v432
        %446 = vmatpush.bf16.msra.mxu0 %v431
        %447 = vmatpush.bf16.msra.mxu0 %v430
        %448 = vmatpush.bf16.msra.mxu0 %v429
        %449 = vmatpush.bf16.msra.mxu0 %v428
        %450 = vmatpush.bf16.msra.mxu0 %v427
        %451 = vmatmul.bf16.gmra.mxu0 %v379
        %v452 = vpop.f32.mrf.mxu0
        %v453 = vadd.f32 0.0, %v452
        %v454 = vpop.f32.mrf.mxu0
        %v455 = vadd.f32 0.0, %v454
        %456 = vmatmul.bf16.gmra.mxu0 %v380
        %v457 = vpop.f32.mrf.mxu0
        %v458 = vadd.f32 0.0, %v457
        %v459 = vpop.f32.mrf.mxu0
        %v460 = vadd.f32 0.0, %v459
        %461 = vmatmul.bf16.gmra.mxu0 %v381
        %v462 = vpop.f32.mrf.mxu0
        %v463 = vadd.f32 0.0, %v462
        %v464 = vpop.f32.mrf.mxu0
        %v465 = vadd.f32 0.0, %v464
        %466 = vmatmul.bf16.gmra.mxu0 %v382
        %v467 = vpop.f32.mrf.mxu0
        %v468 = vadd.f32 0.0, %v467
        %v469 = vpop.f32.mrf.mxu0
        %v470 = vadd.f32 0.0, %v469
        %471 = vmatmul.bf16.gmra.mxu0 %v383
        %v472 = vpop.f32.mrf.mxu0
        %v473 = vadd.f32 0.0, %v472
        %v474 = vpop.f32.mrf.mxu0
        %v475 = vadd.f32 0.0, %v474
        %476 = vmatmul.bf16.gmra.mxu0 %v384
        %v477 = vpop.f32.mrf.mxu0
        %v478 = vadd.f32 0.0, %v477
        %v479 = vpop.f32.mrf.mxu0
        %v480 = vadd.f32 0.0, %v479
        %481 = vmatmul.bf16.gmra.mxu0 %v385
        %v482 = vpop.f32.mrf.mxu0
        %v483 = vadd.f32 0.0, %v482
        %v484 = vpop.f32.mrf.mxu0
        %v485 = vadd.f32 0.0, %v484
        %486 = vmatmul.bf16.gmra.mxu0 %v386
        %v487 = vpop.f32.mrf.mxu0
        %v488 = vadd.f32 0.0, %v487
        %v489 = vpop.f32.mrf.mxu0
        %v490 = vadd.f32 0.0, %v489
        %491 = vdwg.mxu0
        %v492 = vld [vmem:[#allocation2] sm:$0xff]
        %v493 = vld [vmem:[#allocation2 + $0x8] sm:$0xff]
        %v494 = vld [vmem:[#allocation2 + $0x10] sm:$0xff]
        %v495 = vld [vmem:[#allocation2 + $0x18] sm:$0xff]
        %v496 = vld [vmem:[#allocation2 + $0x20] sm:$0xff]
        %v497 = vld [vmem:[#allocation2 + $0x28] sm:$0xff]
        %v498 = vld [vmem:[#allocation2 + $0x30] sm:$0xff]
        %v499 = vld [vmem:[#allocation2 + $0x38] sm:$0xff]
        %v500 = vld [vmem:[#allocation2 + $0x40] sm:$0xff]
        %v501 = vld [vmem:[#allocation2 + $0x48] sm:$0xff]
        %v502 = vld [vmem:[#allocation2 + $0x50] sm:$0xff]
        %v503 = vld [vmem:[#allocation2 + $0x58] sm:$0xff]
        %v504 = vld [vmem:[#allocation2 + $0x60] sm:$0xff]
        %v505 = vld [vmem:[#allocation2 + $0x68] sm:$0xff]
        %v506 = vld [vmem:[#allocation2 + $0x70] sm:$0xff]
        %v507 = vld [vmem:[#allocation2 + $0x78] sm:$0xff]
        %v508 = vld [vmem:[%s246] sm:$0xf]
        %v509 = vld [vmem:[%s246 + $0x4] sm:$0xf]
        %v510 = vld [vmem:[%s246 + $0x8] sm:$0xf]
        %v511 = vld [vmem:[%s246 + $0xc] sm:$0xf]
        %v512 = vld [vmem:[%s246 + $0x10] sm:$0xf]
        %v513 = vld [vmem:[%s246 + $0x14] sm:$0xf]
        %v514 = vld [vmem:[%s246 + $0x18] sm:$0xf]
        %v515 = vld [vmem:[%s246 + $0x1c] sm:$0xf]
        %v516 = vld [vmem:[%s246 + $0x20] sm:$0xf]
        %v517 = vld [vmem:[%s246 + $0x24] sm:$0xf]
        %v518 = vld [vmem:[%s246 + $0x28] sm:$0xf]
        %v519 = vld [vmem:[%s246 + $0x2c] sm:$0xf]
        %v520 = vld [vmem:[%s246 + $0x30] sm:$0xf]
        %v521 = vld [vmem:[%s246 + $0x34] sm:$0xf]
        %v522 = vld [vmem:[%s246 + $0x38] sm:$0xf]
        %v523 = vld [vmem:[%s246 + $0x3c] sm:$0xf]
        %v524 = vpack.c.bf16 %v455, %v453
        %v525 = vpack.c.bf16 %v460, %v458
        %v526 = vpack.c.bf16 %v465, %v463
        %v527 = vpack.c.bf16 %v470, %v468
        %v528 = vpack.c.bf16 %v475, %v473
        %v529 = vpack.c.bf16 %v480, %v478
        %v530 = vpack.c.bf16 %v485, %v483
        %v531 = vpack.c.bf16 %v490, %v488
        %v548 = vunpack.c.l.b16 %v508
        %v549 = vunpack.c.l.b16 %v509
        %v550 = vunpack.c.l.b16 %v510
        %v551 = vunpack.c.l.b16 %v511
        %v552 = vunpack.c.l.b16 %v512
        %v553 = vunpack.c.l.b16 %v513
        %v554 = vunpack.c.l.b16 %v514
        %v555 = vunpack.c.l.b16 %v515
        %v556 = vunpack.c.l.b16 %v516
        %v557 = vunpack.c.l.b16 %v517
        %v558 = vunpack.c.l.b16 %v518
        %v559 = vunpack.c.l.b16 %v519
        %v560 = vunpack.c.l.b16 %v520
        %v561 = vunpack.c.l.b16 %v521
        %v562 = vunpack.c.l.b16 %v522
        %v563 = vunpack.c.l.b16 %v523
        %v564 = vpack.c.b16 %v549, %v548
        %v565 = vpack.c.b16 %v551, %v550
        %v566 = vpack.c.b16 %v553, %v552
        %v567 = vpack.c.b16 %v555, %v554
        %v568 = vpack.c.b16 %v557, %v556
        %v569 = vpack.c.b16 %v559, %v558
        %v570 = vpack.c.b16 %v561, %v560
        %v571 = vpack.c.b16 %v563, %v562
        %580 = vmatpush.bf16.msra.mxu0 %v531
        %581 = vmatpush.bf16.msra.mxu0 %v530
        %582 = vmatpush.bf16.msra.mxu0 %v529
        %583 = vmatpush.bf16.msra.mxu0 %v528
        %584 = vmatpush.bf16.msra.mxu0 %v527
        %585 = vmatpush.bf16.msra.mxu0 %v526
        %586 = vmatpush.bf16.msra.mxu0 %v525
        %587 = vmatpush.bf16.msra.mxu0 %v524
        %588 = vmatmul.bf16.gmra.mxu0 %v564
        %v589 = vpop.f32.mrf.mxu0
        %v590 = vadd.f32 0.0, %v589
        %v591 = vpop.f32.mrf.mxu0
        %v592 = vadd.f32 0.0, %v591
        %593 = vmatmul.bf16.gmra.mxu0 %v565
        %v594 = vpop.f32.mrf.mxu0
        %v595 = vadd.f32 0.0, %v594
        %v596 = vpop.f32.mrf.mxu0
        %v597 = vadd.f32 0.0, %v596
        %598 = vmatmul.bf16.gmra.mxu0 %v566
        %v599 = vpop.f32.mrf.mxu0
        %v600 = vadd.f32 0.0, %v599
        %v601 = vpop.f32.mrf.mxu0
        %v602 = vadd.f32 0.0, %v601
        %603 = vmatmul.bf16.gmra.mxu0 %v567
        %v604 = vpop.f32.mrf.mxu0
        %v605 = vadd.f32 0.0, %v604
        %v606 = vpop.f32.mrf.mxu0
        %v607 = vadd.f32 0.0, %v606
        %608 = vmatmul.bf16.gmra.mxu0 %v568
        %v609 = vpop.f32.mrf.mxu0
        %v610 = vadd.f32 0.0, %v609
        %v611 = vpop.f32.mrf.mxu0
        %v612 = vadd.f32 0.0, %v611
        %613 = vmatmul.bf16.gmra.mxu0 %v569
        %v614 = vpop.f32.mrf.mxu0
        %v615 = vadd.f32 0.0, %v614
        %v616 = vpop.f32.mrf.mxu0
        %v617 = vadd.f32 0.0, %v616
        %618 = vmatmul.bf16.gmra.mxu0 %v570
        %v619 = vpop.f32.mrf.mxu0
        %v620 = vadd.f32 0.0, %v619
        %v621 = vpop.f32.mrf.mxu0
        %v622 = vadd.f32 0.0, %v621
        %623 = vmatmul.bf16.gmra.mxu0 %v571
        %v624 = vpop.f32.mrf.mxu0
        %v625 = vadd.f32 0.0, %v624
        %v626 = vpop.f32.mrf.mxu0
        %v627 = vadd.f32 0.0, %v626
        %628 = vdwg.mxu0
        %v629 = vadd.f32 %v492, %v590
        %v630 = vadd.f32 %v493, %v592
        %v631 = vadd.f32 %v494, %v595
        %v632 = vadd.f32 %v495, %v597
        %v633 = vadd.f32 %v496, %v600
        %v634 = vadd.f32 %v497, %v602
        %v635 = vadd.f32 %v498, %v605
        %v636 = vadd.f32 %v499, %v607
        %v637 = vadd.f32 %v500, %v610
        %v638 = vadd.f32 %v501, %v612
        %v639 = vadd.f32 %v502, %v615
        %v640 = vadd.f32 %v503, %v617
        %v641 = vadd.f32 %v504, %v620
        %v642 = vadd.f32 %v505, %v622
        %v643 = vadd.f32 %v506, %v625
        %v644 = vadd.f32 %v507, %v627
        %645 = vst [vmem:[#allocation2] sm:$0xff] %v629
        %646 = vst [vmem:[#allocation2 + $0x8] sm:$0xff] %v630
        %647 = vst [vmem:[#allocation2 + $0x10] sm:$0xff] %v631
        %648 = vst [vmem:[#allocation2 + $0x18] sm:$0xff] %v632
        %649 = vst [vmem:[#allocation2 + $0x20] sm:$0xff] %v633
        %650 = vst [vmem:[#allocation2 + $0x28] sm:$0xff] %v634
        %651 = vst [vmem:[#allocation2 + $0x30] sm:$0xff] %v635
        %652 = vst [vmem:[#allocation2 + $0x38] sm:$0xff] %v636
        %653 = vst [vmem:[#allocation2 + $0x40] sm:$0xff] %v637
        %654 = vst [vmem:[#allocation2 + $0x48] sm:$0xff] %v638
        %655 = vst [vmem:[#allocation2 + $0x50] sm:$0xff] %v639
        %656 = vst [vmem:[#allocation2 + $0x58] sm:$0xff] %v640
        %657 = vst [vmem:[#allocation2 + $0x60] sm:$0xff] %v641
        %658 = vst [vmem:[#allocation2 + $0x68] sm:$0xff] %v642
        %659 = vst [vmem:[#allocation2 + $0x70] sm:$0xff] %v643
        %660 = vst [vmem:[#allocation2 + $0x78] sm:$0xff] %v644
        %p661 = scmp.eq.s32.totalorder %s29, 1
        // Predicated region
        $region53: #{tpu_custom_call.1} parent=35 // pred_check
          %p662 = pneg %p661
        $region54: #{tpu_custom_call.1} parent=35 // pred_check_branch
          %664 = sbr.rel (%p662) target = $region56
        $region55: #{tpu_custom_call.1} parent=35 // pred_region
          %v665 = vld [vmem:[#allocation2] sm:$0xff]
          %v666 = vld [vmem:[#allocation2 + $0x8] sm:$0xff]
          %v667 = vld [vmem:[#allocation2 + $0x10] sm:$0xff]
          %v668 = vld [vmem:[#allocation2 + $0x18] sm:$0xff]
          %v669 = vld [vmem:[#allocation2 + $0x20] sm:$0xff]
          %v670 = vld [vmem:[#allocation2 + $0x28] sm:$0xff]
          %v671 = vld [vmem:[#allocation2 + $0x30] sm:$0xff]
          %v672 = vld [vmem:[#allocation2 + $0x38] sm:$0xff]
          %v673 = vld [vmem:[#allocation2 + $0x40] sm:$0xff]
          %v674 = vld [vmem:[#allocation2 + $0x48] sm:$0xff]
          %v675 = vld [vmem:[#allocation2 + $0x50] sm:$0xff]
          %v676 = vld [vmem:[#allocation2 + $0x58] sm:$0xff]
          %v677 = vld [vmem:[#allocation2 + $0x60] sm:$0xff]
          %v678 = vld [vmem:[#allocation2 + $0x68] sm:$0xff]
          %v679 = vld [vmem:[#allocation2 + $0x70] sm:$0xff]
          %v680 = vld [vmem:[#allocation2 + $0x78] sm:$0xff]
          %v681 = vld [vmem:[%s3] sm:$0x1]
          %v683 = vperm.slane %v681, 0
          %v685 = vadd.f32 %v665, %v683
          %v686 = vadd.f32 %v666, %v683
          %v687 = vadd.f32 %v667, %v683
          %v688 = vadd.f32 %v668, %v683
          %v689 = vadd.f32 %v669, %v683
          %v690 = vadd.f32 %v670, %v683
          %v691 = vadd.f32 %v671, %v683
          %v692 = vadd.f32 %v672, %v683
          %v693 = vadd.f32 %v673, %v683
          %v694 = vadd.f32 %v674, %v683
          %v695 = vadd.f32 %v675, %v683
          %v696 = vadd.f32 %v676, %v683
          %v697 = vadd.f32 %v677, %v683
          %v698 = vadd.f32 %v678, %v683
          %v699 = vadd.f32 %v679, %v683
          %v700 = vadd.f32 %v680, %v683
          %v701 = vmax.f32 %v685, 0.0
          %v702 = vmax.f32 %v686, 0.0
          %v703 = vmax.f32 %v687, 0.0
          %v704 = vmax.f32 %v688, 0.0
          %v705 = vmax.f32 %v689, 0.0
          %v706 = vmax.f32 %v690, 0.0
          %v707 = vmax.f32 %v691, 0.0
          %v708 = vmax.f32 %v692, 0.0
          %v709 = vmax.f32 %v693, 0.0
          %v710 = vmax.f32 %v694, 0.0
          %v711 = vmax.f32 %v695, 0.0
          %v712 = vmax.f32 %v696, 0.0
          %v713 = vmax.f32 %v697, 0.0
          %v714 = vmax.f32 %v698, 0.0
          %v715 = vmax.f32 %v699, 0.0
          %v716 = vmax.f32 %v700, 0.0
          %v717 = vpack.c.bf16 %v701, %v701
          %v718 = vpack.c.bf16 %v702, %v702
          %v719 = vpack.c.bf16 %v703, %v703
          %v720 = vpack.c.bf16 %v704, %v704
          %v721 = vpack.c.bf16 %v705, %v705
          %v722 = vpack.c.bf16 %v706, %v706
          %v723 = vpack.c.bf16 %v707, %v707
          %v724 = vpack.c.bf16 %v708, %v708
          %v725 = vpack.c.bf16 %v709, %v709
          %v726 = vpack.c.bf16 %v710, %v710
          %v727 = vpack.c.bf16 %v711, %v711
          %v728 = vpack.c.bf16 %v712, %v712
          %v729 = vpack.c.bf16 %v713, %v713
          %v730 = vpack.c.bf16 %v714, %v714
          %v731 = vpack.c.bf16 %v715, %v715
          %v732 = vpack.c.bf16 %v716, %v716
          %733 = vst [vmem:[%s291] sm:$0xf] %v717
          %734 = vst [vmem:[%s291 + $0x4] sm:$0xf] %v718
          %735 = vst [vmem:[%s291 + $0x8] sm:$0xf] %v719
          %736 = vst [vmem:[%s291 + $0xc] sm:$0xf] %v720
          %737 = vst [vmem:[%s291 + $0x10] sm:$0xf] %v721
          %738 = vst [vmem:[%s291 + $0x14] sm:$0xf] %v722
          %739 = vst [vmem:[%s291 + $0x18] sm:$0xf] %v723
          %740 = vst [vmem:[%s291 + $0x1c] sm:$0xf] %v724
          %741 = vst [vmem:[%s291 + $0x20] sm:$0xf] %v725
          %742 = vst [vmem:[%s291 + $0x24] sm:$0xf] %v726
          %743 = vst [vmem:[%s291 + $0x28] sm:$0xf] %v727
          %744 = vst [vmem:[%s291 + $0x2c] sm:$0xf] %v728
          %745 = vst [vmem:[%s291 + $0x30] sm:$0xf] %v729
          %746 = vst [vmem:[%s291 + $0x34] sm:$0xf] %v730
          %747 = vst [vmem:[%s291 + $0x38] sm:$0xf] %v731
          %748 = vst [vmem:[%s291 + $0x3c] sm:$0xf] %v732
        $region56: #{tpu_custom_call.1} parent=35 // pred_fallthru
          _
        %s749 = sand.u32 %s140, 1
        %s750 = scalar_lea.sflag [#allocation5], %s749
        %s751 = sand.u32 %s140, 1
        %s752 = smul.addr %s751, 64
        %s753 = scalar_lea.vmem [#allocation9], %s752
        // Predicated region
        $region57: #{tpu_custom_call.1} parent=35 // pred_check
          %p754 = pneg %p150
        $region58: #{tpu_custom_call.1} parent=35 // pred_check_branch
          %756 = sbr.rel (%p754) target = $region60
        $region59: #{tpu_custom_call.1} parent=35 // pred_region
          %s757 = smul.u32 16, %s28
          %759 = vsyncadd %s750, 0
          %s760 = smul.addr %s757, 4
          %s761 = scalar_lea.hbm %s4, %s760
          %s762 = sshll.u32 %s753, 4
          %s763 = int_to_ptr.vmem [resolvable:$true] %s762
          %s764 = sshll.u32 %s761, 4
          %s765 = int_to_ptr.hbm [resolvable:$true] %s764
          %770 = dma.vmem_to_hbm [thread:$0]  %s763, 1024, %s765, %s750, 64, 64, 4
        $region60: #{tpu_custom_call.1} parent=35 // pred_fallthru
          _
      $region36: #{tpu_custom_call.1} parent=5 // pred_fallthru
        _
      %p771 = scmp.le.s32.totalorder 2, %s19
      // Predicated region
      $region61: #{tpu_custom_call.1} parent=5 // pred_check
        %p772 = pneg %p771
      $region62: #{tpu_custom_call.1} parent=5 // pred_check_branch
        %774 = sbr.rel (%p772) target = $region64
      $region63: #{tpu_custom_call.1} parent=5 // pred_region
        %s775 = ssub.s32 %s19, 2
        // Predicated region
        $region65: #{tpu_custom_call.1} parent=63 // pred_check
          %p776 = pneg %p156
        $region66: #{tpu_custom_call.1} parent=63 // pred_check_branch
          %778 = sbr.rel (%p776) target = $region68
        $region67: #{tpu_custom_call.1} parent=63 // pred_region
          %s779 = sand.u32 %s141, 1
          %s780 = scalar_lea.sflag [#allocation5], %s779
          %s781 = sand.u32 %s141, 1
          %s782 = smul.addr %s781, 64
          %s783 = scalar_lea.vmem [#allocation9], %s782
          %785 = dma.done %s780, 1024
        $region68: #{tpu_custom_call.1} parent=63 // pred_fallthru
          _
      $region64: #{tpu_custom_call.1} parent=5 // pred_fallthru
        _
    $region6: #{tpu_custom_call.1} parent=1 // loop_footer
      %s23 = sadd.s32 1, %s19
    $region7: #{tpu_custom_call.1} parent=1 // loop_footer_branch
      %18 = sbr.rel target = $region3
    $region8: #{tpu_custom_call.1} parent=1 // loop_exit
      _
    %786 = vsyncpa [#allocation4], 1
    %s787 = scalar_lea.sflag [#allocation4], 1
    %788 = vsyncpa %s787, 1
    %789 = vsyncpa [#allocation7], 1
    %s790 = scalar_lea.sflag [#allocation7], 1
    %791 = vsyncpa %s790, 1
    %792 = vsyncpa [#allocation5], 1
    %s793 = scalar_lea.sflag [#allocation5], 1
    %794 = vsyncpa %s793, 1

</llo_original>
